<compile_context>
chip_gen: v5e
topology: v5e:2x2
jax: 0.10.0
libtpu: 0.0.40
codegen_flags: <defaults>
</compile_context>

<pallas_src>
import jax
import jax.numpy as jnp
from jax import lax
from jax.experimental import pallas as pl
from jax.experimental.pallas import tpu as pltpu

EPS = 1e-5
H1, H2 = 128, 64          # hidden sizes fixed by the module spec
BIAS_LANES = 128          # width of the packed bias slab


def _round_up(n, m):
    return ((n + m - 1) // m) * m


# ----------------------------------------------------------------------------
# Kernel: 3 matmuls (bf16 operands, f32 accumulate) + f32 bias/ReLU epilogue.
# Output is transposed: (1, TB) with batch on lanes (lane-dense store).
# ----------------------------------------------------------------------------
def _mlp_kernel(x_ref, w1_ref, w2_ref, w3_ref, bias_ref, o_ref):
    x = x_ref[...]                              # (TB, D) bf16

    b1 = bias_ref[0:1, :]                       # (1, 128) f32  (BN-folded)
    b2 = bias_ref[1:2, :H2]                     # (1, 64)  f32  (BN-folded)
    b3 = bias_ref[2:3, 0:1]                     # (1, 1)   f32

    # Linear(D,128) + folded BN1 + ReLU   (Dropout = identity in eval)
    h1 = jnp.dot(x, w1_ref[...], preferred_element_type=jnp.float32) + b1
    h1 = jnp.maximum(h1, 0.0)

    # Linear(128,64) + folded BN2 + ReLU  (Dropout = identity in eval)
    h2 = jnp.dot(h1.astype(jnp.bfloat16), w2_ref[...],
                 preferred_element_type=jnp.float32) + b2
    h2 = jnp.maximum(h2, 0.0)

    # Linear(64,1), transposed: (1,64) x (TB,64)^T -> (1, TB), batch on lanes.
    o = lax.dot_general(w3_ref[...], h2.astype(jnp.bfloat16),
                        dimension_numbers=(((1,), (1,)), ((), ())),
                        preferred_element_type=jnp.float32)
    o_ref[...] = o + b3


# ----------------------------------------------------------------------------
# Wrapper
# ----------------------------------------------------------------------------
def neural_network_forward(x, folded, *, block_batch=1024):
    """x: (B, D) f32 or bf16.  folded: output of fold_params()."""
    B, D = x.shape
    if x.dtype != jnp.bfloat16:
        # Ideally the producer already emits bf16 so this fuses upstream.
        x = x.astype(jnp.bfloat16)

    if B <= block_batch:
        TB = _round_up(B, 8)                    # single (possibly ragged) block
    else:
        # Multi-block: tile must be a multiple of 128 (lane-dense out blocks)
        # and small enough that the grid has >= 2 steps (v7x megacore).
        cap = max(128, (block_batch // 128) * 128)
        TB = min(cap, max(128, _round_up(pl.cdiv(B, 2), 128)))
    grid = pl.cdiv(B, TB)
    Bp = grid * TB                              # output over-allocation only

    # Scoped-VMEM budget from the actual footprint (+ headroom), <= 48 MiB.
    vmem_bytes = (2 * TB * D * 2                # x, double-buffered, bf16
                  + 2 * TB * 4                  # out, double-buffered, f32
                  + D * H1 * 2 + H1 * H2 * 2 + H2 * 2   # resident bf16 weights
                  + 3 * BIAS_LANES * 4)         # bias slab
    vmem_limit = min(int(vmem_bytes) + (16 << 20), 48 << 20)

    out = pl.pallas_call(
        _mlp_kernel,
        out_shape=jax.ShapeDtypeStruct((1, Bp), jnp.float32),
        grid_spec=pltpu.PrefetchScalarGridSpec(
            num_scalar_prefetch=0,
            grid=(grid,),
            in_specs=[
                pl.BlockSpec((TB, D), lambda i: (i, 0)),          # x (pipelined)
                pl.BlockSpec((D, H1), lambda i: (0, 0)),          # w1 (resident)
                pl.BlockSpec((H1, H2), lambda i: (0, 0)),         # w2 (resident)
                pl.BlockSpec((1, H2), lambda i: (0, 0)),          # w3^T (resident)
                pl.BlockSpec((3, BIAS_LANES), lambda i: (0, 0)),  # bias slab
            ],
            out_specs=pl.BlockSpec((1, TB), lambda i: (0, i)),    # batch on lanes
        ),
        compiler_params=pltpu.CompilerParams(
            dimension_semantics=("parallel",),
            vmem_limit_bytes=vmem_limit),
    )(x, folded["w1"], folded["w2"], folded["w3"], folded["bias"])

    return out[0, :B][:, None]                  # (B, 1): strip pad, restore column


# ----------------------------------------------------------------------------
# Host-side parameter preparation (BN fold, packing, bf16 cast).
# ----------------------------------------------------------------------------
def fold_params(p, weight_dtype=jnp.bfloat16):
    """Fold BatchNorm (eval mode) into the preceding Linear and pack params."""
    def fold(w, b, gamma, beta, mean, var):
        s = gamma * lax.rsqrt(var + EPS)              # (1, out)
        return w * s, (b - mean) * s + beta

    w1f, b1f = fold(p["w1"], p["b1"], p["bn1_gamma"], p["bn1_beta"],
                    p["bn1_mean"], p["bn1_var"])
    w2f, b2f = fold(p["w2"], p["b2"], p["bn2_gamma"], p["bn2_beta"],
                    p["bn2_mean"], p["bn2_var"])

    # Final layer stored transposed: (1, 64).  Bias slab is (3, 128):
    #   row 0: b1 (128), row 1: b2 (64, zero-padded), row 2: b3 at column 0.
    w3t = p["w3"].T                                    # (1, 64)
    b2p = jnp.zeros((1, BIAS_LANES), jnp.float32).at[:, :H2].set(b2f)
    b3p = jnp.zeros((1, BIAS_LANES), jnp.float32).at[:, :1].set(p["b3"])
    bias = jnp.concatenate([b1f, b2p, b3p], axis=0)    # (3, 128) f32 slab

    return {
        "w1": w1f.astype(weight_dtype),
        "w2": w2f.astype(weight_dtype),
        "w3": w3t.astype(weight_dtype),
        "bias": bias.astype(jnp.float32),
    }


def init_params(key, input_size):
    """Synthetic parameters matching the PyTorch module's shapes.

    Linear weights stored transposed vs. PyTorch, i.e. (in_features, out_features).
    """
    ks = jax.random.split(key, 6)
    return {
        "w1": jax.random.normal(ks[0], (input_size, H1), jnp.float32) * 0.05,
        "b1": jax.random.normal(ks[1], (1, H1), jnp.float32) * 0.05,
        "bn1_gamma": jnp.ones((1, H1), jnp.float32),
        "bn1_beta": jnp.full((1, H1), 0.1, jnp.float32),
        "bn1_mean": jnp.full((1, H1), 0.05, jnp.float32),
        "bn1_var": jnp.full((1, H1), 1.5, jnp.float32),
        "w2": jax.random.normal(ks[2], (H1, H2), jnp.float32) * 0.05,
        "b2": jax.random.normal(ks[3], (1, H2), jnp.float32) * 0.05,
        "bn2_gamma": jnp.ones((1, H2), jnp.float32),
        "bn2_beta": jnp.full((1, H2), -0.1, jnp.float32),
        "bn2_mean": jnp.full((1, H2), -0.05, jnp.float32),
        "bn2_var": jnp.full((1, H2), 0.8, jnp.float32),
        "w3": jax.random.normal(ks[4], (H2, 1), jnp.float32) * 0.05,
        "b3": jax.random.normal(ks[5], (1, 1), jnp.float32) * 0.05,
    }


# ----------------------------------------------------------------------------
# References for correctness checking.
# ----------------------------------------------------------------------------
def _reference_forward_f32(x, p):
    """Pure-f32 reference with explicit BN math (ground truth semantics)."""
    h1 = x @ p["w1"] + p["b1"]
    h1 = (h1 - p["bn1_mean"]) / jnp.sqrt(p["bn1_var"] + EPS) * p["bn1_gamma"] + p["bn1_beta"]
    h1 = jnp.maximum(h1, 0.0)
    h2 = h1 @ p["w2"] + p["b2"]
    h2 = (h2 - p["bn2_mean"]) / jnp.sqrt(p["bn2_var"] + EPS) * p["bn2_gamma"] + p["bn2_beta"]
    h2 = jnp.maximum(h2, 0.0)
    return h2 @ p["w3"] + p["b3"]


def _reference_forward_folded_bf16(x, folded):
    """Reference that mirrors the kernel's bf16-matmul / f32-epilogue math."""
    b1 = folded["bias"][0:1, :]
    b2 = folded["bias"][1:2, :H2]
    b3 = folded["bias"][2, 0]
    h1 = jnp.dot(x.astype(jnp.bfloat16), folded["w1"],
                 preferred_element_type=jnp.float32) + b1
    h1 = jnp.maximum(h1, 0.0)
    h2 = jnp.dot(h1.astype(jnp.bfloat16), folded["w2"],
                 preferred_element_type=jnp.float32) + b2
    h2 = jnp.maximum(h2, 0.0)
    out = jnp.dot(h2.astype(jnp.bfloat16), folded["w3"].T,
                  preferred_element_type=jnp.float32) + b3
    return out                                      # (B, 1)


if __name__ == "__main__":
    key = jax.random.PRNGKey(0)
    k_x, k_p = jax.random.split(key)

    batch, input_size = 8, 32
    x = jax.random.normal(k_x, (batch, input_size), jnp.float32)
    params = init_params(k_p, input_size)
    folded = fold_params(params)

    out = jax.block_until_ready(neural_network_forward(x, folded))
    assert out.shape == (batch, 1), out.shape

    # Tight check against a reference with identical bf16-matmul numerics.
    ref_bf16 = _reference_forward_folded_bf16(x, folded)
    assert jnp.allclose(out, ref_bf16, atol=1e-4, rtol=1e-3), (out, ref_bf16)

    # Loose check against the full-f32 BN reference (bf16 weight rounding).
    ref_f32 = _reference_forward_f32(x, params)
    assert jnp.allclose(out, ref_f32, atol=3e-2, rtol=3e-2), (out, ref_f32)

    # Ragged batch, single boundary block (no host-side padding of x).
    x13 = jax.random.normal(jax.random.PRNGKey(1), (13, input_size), jnp.float32)
    out13 = jax.block_until_ready(neural_network_forward(x13, folded))
    assert out13.shape == (13, 1)
    assert jnp.allclose(out13, _reference_forward_folded_bf16(x13, folded),
                        atol=1e-4, rtol=1e-3)

    # Ragged batch, multi-block grid (exercises pipelined 'parallel' axis).
    x1k = jax.random.normal(jax.random.PRNGKey(2), (1000, input_size), jnp.float32)
    out1k = jax.block_until_ready(
        neural_network_forward(x1k, folded, block_batch=256))
    assert out1k.shape == (1000, 1)
    assert jnp.allclose(out1k, _reference_forward_folded_bf16(x1k, folded),
                        atol=1e-4, rtol=1e-3)

    print("KERNEL_OK")
</pallas_src>

<mosaic_0001>
module attributes {stable_mosaic.version = 11 : i64} {
  func.func @_mlp_kernel(%arg0: i32, %arg1: memref<8x32xbf16, #tpu.memory_space<vmem>>, %arg2: memref<32x128xbf16, #tpu.memory_space<vmem>>, %arg3: memref<128x64xbf16, #tpu.memory_space<vmem>>, %arg4: memref<1x64xbf16, #tpu.memory_space<vmem>>, %arg5: memref<3x128xf32, #tpu.memory_space<vmem>>, %arg6: memref<1x8xf32, #tpu.memory_space<vmem>>) attributes {dimension_semantics = [#tpu.dimension_semantics<parallel>], iteration_bounds = array<i64: 1>, scalar_prefetch = 0 : i64, scratch_operands = 0 : i64, tpu.core_type = #tpu.core_type<tc>, window_params = [{transform_indices = @transform_0, window_bounds = array<i64: 8, 32>}, {pipeline_mode = #tpu.pipeline_mode<synchronous>, transform_indices = @transform_1, window_bounds = array<i64: 32, 128>}, {pipeline_mode = #tpu.pipeline_mode<synchronous>, transform_indices = @transform_2, window_bounds = array<i64: 128, 64>}, {pipeline_mode = #tpu.pipeline_mode<synchronous>, transform_indices = @transform_3, window_bounds = array<i64: 1, 64>}, {pipeline_mode = #tpu.pipeline_mode<synchronous>, transform_indices = @transform_4, window_bounds = array<i64: 3, 128>}, {transform_indices = @transform_5, window_bounds = array<i64: 1, 8>}]} {
    %c0 = arith.constant 0 : index
    %c0_0 = arith.constant 0 : index
    %0 = vector.load %arg1[%c0, %c0_0] : memref<8x32xbf16, #tpu.memory_space<vmem>>, vector<8x32xbf16>
    %c0_1 = arith.constant 0 : index
    %c0_2 = arith.constant 0 : index
    %1 = vector.load %arg5[%c0_1, %c0_2] : memref<3x128xf32, #tpu.memory_space<vmem>>, vector<1x128xf32>
    %c1 = arith.constant 1 : index
    %c0_3 = arith.constant 0 : index
    %2 = vector.load %arg5[%c1, %c0_3] : memref<3x128xf32, #tpu.memory_space<vmem>>, vector<1x64xf32>
    %c2 = arith.constant 2 : index
    %c0_4 = arith.constant 0 : index
    %3 = vector.load %arg5[%c2, %c0_4] : memref<3x128xf32, #tpu.memory_space<vmem>>, vector<1x1xf32>
    %c0_5 = arith.constant 0 : index
    %c0_6 = arith.constant 0 : index
    %4 = vector.load %arg2[%c0_5, %c0_6] : memref<32x128xbf16, #tpu.memory_space<vmem>>, vector<32x128xbf16>
    %cst = arith.constant dense<0.000000e+00> : vector<8x128xf32>
    %5 = tpu.matmul %0, %4, %cst {dimension_numbers = #tpu.dot_dimension_numbers<[1], [0], [0], [1], [0, 0, 1, 1], [], []>} : vector<8x32xbf16>, vector<32x128xbf16>, vector<8x128xf32> -> vector<8x128xf32>
    %6 = vector.broadcast %1 : vector<1x128xf32> to vector<8x128xf32>
    %7 = arith.addf %5, %6 : vector<8x128xf32>
    %cst_7 = arith.constant 0.000000e+00 : f32
    %8 = vector.broadcast %cst_7 : f32 to vector<8x128xf32>
    %9 = arith.maximumf %7, %8 : vector<8x128xf32>
    %10 = arith.truncf %9 : vector<8x128xf32> to vector<8x128xbf16>
    %c0_8 = arith.constant 0 : index
    %c0_9 = arith.constant 0 : index
    %11 = vector.load %arg3[%c0_8, %c0_9] : memref<128x64xbf16, #tpu.memory_space<vmem>>, vector<128x64xbf16>
    %cst_10 = arith.constant dense<0.000000e+00> : vector<8x64xf32>
    %12 = tpu.matmul %10, %11, %cst_10 {dimension_numbers = #tpu.dot_dimension_numbers<[1], [0], [0], [1], [0, 0, 1, 1], [], []>} : vector<8x128xbf16>, vector<128x64xbf16>, vector<8x64xf32> -> vector<8x64xf32>
    %13 = vector.broadcast %2 : vector<1x64xf32> to vector<8x64xf32>
    %14 = arith.addf %12, %13 : vector<8x64xf32>
    %cst_11 = arith.constant 0.000000e+00 : f32
    %15 = vector.broadcast %cst_11 : f32 to vector<8x64xf32>
    %16 = arith.maximumf %14, %15 : vector<8x64xf32>
    %c0_12 = arith.constant 0 : index
    %c0_13 = arith.constant 0 : index
    %17 = vector.load %arg4[%c0_12, %c0_13] : memref<1x64xbf16, #tpu.memory_space<vmem>>, vector<1x64xbf16>
    %18 = arith.truncf %16 : vector<8x64xf32> to vector<8x64xbf16>
    %cst_14 = arith.constant dense<0.000000e+00> : vector<1x8xf32>
    %19 = tpu.matmul %17, %18, %cst_14 {dimension_numbers = #tpu.dot_dimension_numbers<[1], [1], [0], [0], [0, 0, 1, 0], [], []>} : vector<1x64xbf16>, vector<8x64xbf16>, vector<1x8xf32> -> vector<1x8xf32>
    %20 = vector.broadcast %3 : vector<1x1xf32> to vector<1x8xf32>
    %21 = arith.addf %19, %20 : vector<1x8xf32>
    %c0_15 = arith.constant 0 : index
    %c0_16 = arith.constant 0 : index
    %22 = vector.load %arg6[%c0_15, %c0_16] : memref<1x8xf32, #tpu.memory_space<vmem>>, vector<1x8xf32>
    tpu.vector_store %arg6[%c0_15, %c0_16], %21 {strides = array<i32>} : memref<1x8xf32, #tpu.memory_space<vmem>>, vector<1x8xf32>,
    return
  }
  func.func @transform_0(%arg0: i32) -> (i32, i32) {
    %c0_i32 = arith.constant 0 : i32
    %c0_i32_0 = arith.constant 0 : i32
    return %arg0, %c0_i32 : i32, i32
  }
  func.func @transform_1(%arg0: i32) -> (i32, i32) {
    %c0_i32 = arith.constant 0 : i32
    %c0_i32_0 = arith.constant 0 : i32
    %c0_i32_1 = arith.constant 0 : i32
    return %c0_i32, %c0_i32_0 : i32, i32
  }
  func.func @transform_2(%arg0: i32) -> (i32, i32) {
    %c0_i32 = arith.constant 0 : i32
    %c0_i32_0 = arith.constant 0 : i32
    %c0_i32_1 = arith.constant 0 : i32
    return %c0_i32, %c0_i32_0 : i32, i32
  }
  func.func @transform_3(%arg0: i32) -> (i32, i32) {
    %c0_i32 = arith.constant 0 : i32
    %c0_i32_0 = arith.constant 0 : i32
    %c0_i32_1 = arith.constant 0 : i32
    return %c0_i32, %c0_i32_0 : i32, i32
  }
  func.func @transform_4(%arg0: i32) -> (i32, i32) {
    %c0_i32 = arith.constant 0 : i32
    %c0_i32_0 = arith.constant 0 : i32
    %c0_i32_1 = arith.constant 0 : i32
    return %c0_i32, %c0_i32_0 : i32, i32
  }
  func.func @transform_5(%arg0: i32) -> (i32, i32) {
    %c0_i32 = arith.constant 0 : i32
    %c0_i32_0 = arith.constant 0 : i32
    return %c0_i32, %arg0 : i32, i32
  }
}

</mosaic_0001>

<llo_original>
// kernel: tpu_custom_call.1
$region0: #{tpu_custom_call.1}
  #allocation0 [shape = 'u32[]', space=smem, size = 0x4, offset = 0x4, fixed_abs, tag = 'smem constant byte address 0x4 - core index']
  #allocation1 [shape = 'u32[72,128]{1,0:T(1,128)}', space=vmem, size = 0x9000, scoped, tag = 'internal scratch']
  %s0 = inlined_call_operand.vmem [shape: bf16[8,32], index: 0, kind: input, shape index: {}]
  %s1 = inlined_call_operand.vmem [shape: bf16[32,128], index: 1, kind: input, shape index: {}]
  %s2 = inlined_call_operand.vmem [shape: bf16[128,64], index: 2, kind: input, shape index: {}]
  %s3 = inlined_call_operand.vmem [shape: bf16[1,64], index: 3, kind: input, shape index: {}]
  %s4 = inlined_call_operand.vmem [shape: f32[3,128], index: 4, kind: input, shape index: {}]
  %s5 = inlined_call_operand.hbm [shape: f32[1,8], index: 5, kind: output, shape index: {}]
  %s6 = sld [smem:[#allocation0]]
  $region30: #{tpu_custom_call.1} parent=0
    _
  %s8 = ssub.s32 1, %s6
  %s9 = scalar_select 0, %s8, %s6
  $region1: #{tpu_custom_call.1} parent=0
    #allocation2 [shape = 'u8[512]{0}', space=vmem, size = 0x400, scoped, tag = 'output window, operand 0, single buffered']
    #allocation3 [shape = 's32[1]{0}', space=sflag, size = 0x4, scoped, tag = 'scoped memory for tpu_custom_call.1']
    %10 = vsyncpa [#allocation3], 0
    // Predicated region
    $region2: #{tpu_custom_call.1} parent=1 // pred_check
      _
    $region3: #{tpu_custom_call.1} parent=1 // pred_check_branch
      %12 = sbr.rel (0) target = $region5
    $region4: #{tpu_custom_call.1} parent=1 // pred_region
      _
    $region5: #{tpu_custom_call.1} parent=1 // pred_fallthru
      _
    // Predicated region
    $region6: #{tpu_custom_call.1} parent=1 // pred_check
      _
    $region7: #{tpu_custom_call.1} parent=1 // pred_check_branch
      %14 = sbr.rel (0) target = $region9
    $region8: #{tpu_custom_call.1} parent=1 // pred_region
      _
    $region9: #{tpu_custom_call.1} parent=1 // pred_fallthru
      _
    // Predicated region
    $region10: #{tpu_custom_call.1} parent=1 // pred_check
      _
    $region11: #{tpu_custom_call.1} parent=1 // pred_check_branch
      %16 = sbr.rel (0) target = $region13
    $region12: #{tpu_custom_call.1} parent=1 // pred_region
      _
    $region13: #{tpu_custom_call.1} parent=1 // pred_fallthru
      _
    // Predicated region
    $region14: #{tpu_custom_call.1} parent=1 // pred_check
      _
    $region15: #{tpu_custom_call.1} parent=1 // pred_check_branch
      %18 = sbr.rel (0) target = $region17
    $region16: #{tpu_custom_call.1} parent=1 // pred_region
      _
    $region17: #{tpu_custom_call.1} parent=1 // pred_fallthru
      _
    // Predicated region
    $region18: #{tpu_custom_call.1} parent=1 // pred_check
      _
    $region19: #{tpu_custom_call.1} parent=1 // pred_check_branch
      %20 = sbr.rel (0) target = $region21
    $region20: #{tpu_custom_call.1} parent=1 // pred_region
      _
    $region21: #{tpu_custom_call.1} parent=1 // pred_fallthru
      _
    %v22 = vld [vmem:[%s0] sm:$0xf]
    %v23 = vld [vmem:[%s4] sm:$0x1]
    %v24 = vld [vmem:[%s4 + $0x1] sm:$0x1]
    %v25 = vld [vmem:[%s4 + $0x2] sm:$0x1]
    %v26 = vld [vmem:[%s1] sm:$0xf]
    %v27 = vld [vmem:[%s1 + $0x4] sm:$0xf]
    %v28 = vld [vmem:[%s1 + $0x8] sm:$0xf]
    %v29 = vld [vmem:[%s1 + $0xc] sm:$0xf]
    %v30 = vperm.slane %v23, 0
    %v35 = vunpack.c.l.b16 %v26
    %v36 = vunpack.c.l.b16 %v27
    %v37 = vunpack.c.l.b16 %v28
    %v38 = vunpack.c.l.b16 %v29
    %v39 = vpack.c.b16 %v36, %v35
    %v40 = vpack.c.b16 %v38, %v37
    %vm43 = vcmask 261120
    %v45 = vsel %vm43, %v22, 0
    %47 = vmatpush.bf16.msra.mxu0 0
    %48 = vmatpush.bf16.msra.mxu0 0
    %49 = vmatpush.bf16.msra.mxu0 0
    %50 = vmatpush.bf16.msra.mxu0 0
    %51 = vmatpush.bf16.msra.mxu0 0
    %52 = vmatpush.bf16.msra.mxu0 0
    %53 = vmatpush.bf16.msra.mxu0 %v40
    %54 = vmatpush.bf16.msra.mxu0 %v39
    %55 = vmatmul.bf16.gmra.mxu0 %v45
    %v56 = vpop.f32.mrf.mxu0
    %v57 = vadd.f32 %v30, %v56
    %v58 = vpop.f32.mrf.mxu0
    %59 = vdwg.mxu0
    %v60 = vmax.f32 %v57, 0.0
    %v61 = vpack.c.bf16 %v60, %v60
    %v62 = vld [vmem:[%s2] sm:$0xf]
    %v63 = vld [vmem:[%s2 + $0x4] sm:$0xf]
    %v64 = vld [vmem:[%s2 + $0x8] sm:$0xf]
    %v65 = vld [vmem:[%s2 + $0xc] sm:$0xf]
    %v66 = vld [vmem:[%s2 + $0x10] sm:$0xf]
    %v67 = vld [vmem:[%s2 + $0x14] sm:$0xf]
    %v68 = vld [vmem:[%s2 + $0x18] sm:$0xf]
    %v69 = vld [vmem:[%s2 + $0x1c] sm:$0xf]
    %v70 = vld [vmem:[%s2 + $0x20] sm:$0xf]
    %v71 = vld [vmem:[%s2 + $0x24] sm:$0xf]
    %v72 = vld [vmem:[%s2 + $0x28] sm:$0xf]
    %v73 = vld [vmem:[%s2 + $0x2c] sm:$0xf]
    %v74 = vld [vmem:[%s2 + $0x30] sm:$0xf]
    %v75 = vld [vmem:[%s2 + $0x34] sm:$0xf]
    %v76 = vld [vmem:[%s2 + $0x38] sm:$0xf]
    %v77 = vld [vmem:[%s2 + $0x3c] sm:$0xf]
    %v78 = vperm.slane %v24, 0
    %v95 = vunpack.c.l.b16 %v62
    %v96 = vunpack.c.l.b16 %v63
    %v97 = vunpack.c.l.b16 %v64
    %v98 = vunpack.c.l.b16 %v65
    %v99 = vunpack.c.l.b16 %v66
    %v100 = vunpack.c.l.b16 %v67
    %v101 = vunpack.c.l.b16 %v68
    %v102 = vunpack.c.l.b16 %v69
    %v103 = vunpack.c.l.b16 %v70
    %v104 = vunpack.c.l.b16 %v71
    %v105 = vunpack.c.l.b16 %v72
    %v106 = vunpack.c.l.b16 %v73
    %v107 = vunpack.c.l.b16 %v74
    %v108 = vunpack.c.l.b16 %v75
    %v109 = vunpack.c.l.b16 %v76
    %v110 = vunpack.c.l.b16 %v77
    %v111 = vpack.c.b16 %v96, %v95
    %v112 = vpack.c.b16 %v98, %v97
    %v113 = vpack.c.b16 %v100, %v99
    %v114 = vpack.c.b16 %v102, %v101
    %v115 = vpack.c.b16 %v104, %v103
    %v116 = vpack.c.b16 %v106, %v105
    %v117 = vpack.c.b16 %v108, %v107
    %v118 = vpack.c.b16 %v110, %v109
    %127 = vmatpush.bf16.msra.mxu0 %v118
    %128 = vmatpush.bf16.msra.mxu0 %v117
    %129 = vmatpush.bf16.msra.mxu0 %v116
    %130 = vmatpush.bf16.msra.mxu0 %v115
    %131 = vmatpush.bf16.msra.mxu0 %v114
    %132 = vmatpush.bf16.msra.mxu0 %v113
    %133 = vmatpush.bf16.msra.mxu0 %v112
    %134 = vmatpush.bf16.msra.mxu0 %v111
    %135 = vmatmul.bf16.gmra.mxu0 %v61
    %v136 = vpop.f32.mrf.mxu0
    %v137 = vadd.f32 %v78, %v136
    %v138 = vpop.f32.mrf.mxu0
    %139 = vdwg.mxu0
    %v140 = vmax.f32 %v137, 0.0
    %v141 = vld [vmem:[%s3] sm:$0x1]
    %v142 = vpack.c.bf16 %v140, %v140
    %144 = vset.pattern.permute.xlu0 0
    %145 = vperm.xlu0 %144, %v25
    %v146 = vpop.permute.xlu0 %145
    %vm148 = vcmask 523264
    %v150 = vsel %vm148, %v141, 0
    %v153 = vsel %vm148, %v142, 0
    %155 = vmatpush.bf16.xpose.msra.mxu0 0
    %156 = vmatpush.bf16.xpose.msra.mxu0 0
    %157 = vmatpush.bf16.xpose.msra.mxu0 0
    %158 = vmatpush.bf16.xpose.msra.mxu0 0
    %159 = vmatpush.bf16.xpose.msra.mxu0 0
    %160 = vmatpush.bf16.xpose.msra.mxu0 0
    %161 = vmatpush.bf16.xpose.msra.mxu0 0
    %162 = vmatpush.bf16.xpose.msra.mxu0 %v153
    %163 = vmatmul.bf16.gmra.mxu0 %v150
    %v164 = vpop.f32.mrf.mxu0
    %v165 = vadd.f32 %v146, %v164
    %v166 = vpop.f32.mrf.mxu0
    %167 = vdwg.mxu0
    %vm168 = vcmask 57344
    %169 = vst.msk [vmem:[#allocation2] sm:$0x1] %vm168, %v165
    // Predicated region
    $region22: #{tpu_custom_call.1} parent=1 // pred_check
      _
    $region23: #{tpu_custom_call.1} parent=1 // pred_check_branch
      %171 = sbr.rel (0) target = $region25
    $region24: #{tpu_custom_call.1} parent=1 // pred_region
      %173 = vsyncadd [#allocation3], 0
      %s175 = sshll.u32 [#allocation2], 4
      %s176 = int_to_ptr.vmem [resolvable:$true] %s175
      %s177 = sshll.u32 %s5, 4
      %s178 = int_to_ptr.hbm [resolvable:$true] %s177
      %180 = dma.vmem_to_hbm [thread:$0]  %s176, 16, %s178, [#allocation3]
    $region25: #{tpu_custom_call.1} parent=1 // pred_fallthru
      _
    // Predicated region
    $region26: #{tpu_custom_call.1} parent=1 // pred_check
      _
    $region27: #{tpu_custom_call.1} parent=1 // pred_check_branch
      %182 = sbr.rel (0) target = $region29
    $region28: #{tpu_custom_call.1} parent=1 // pred_region
      %184 = dma.done [#allocation3], 16
    $region29: #{tpu_custom_call.1} parent=1 // pred_fallthru
      _
    %185 = vsyncpa [#allocation3], 1

</llo_original>
